<compile_context>
chip_gen: v6e
topology: v6e:2x2x1
jax: 0.10.0
libtpu: 0.0.40
codegen_flags: <defaults>
</compile_context>

<pallas_src>
import math
import functools

import jax
import jax.numpy as jnp
from jax.experimental import pallas as pl
from jax.experimental.pallas import tpu as pltpu


# ----------------------------------------------------------------------------
# Generation-aware VMEM budget (48 MiB on v7x, ~96 MiB on v5e/v6e)
# ----------------------------------------------------------------------------
def _default_vmem_limit():
    try:
        cap = int(pltpu.get_tpu_info().vmem_capacity_bytes)
    except Exception:
        cap = 64 * 1024 * 1024
    return max(32 * 1024 * 1024, min(cap * 3 // 4, 112 * 1024 * 1024))


_VMEM_LIMIT = _default_vmem_limit()


def _cparams(semantics):
    return pltpu.CompilerParams(dimension_semantics=semantics,
                                vmem_limit_bytes=_VMEM_LIMIT)


def _round_up(x, m):
    return ((x + m - 1) // m) * m


def _tile_and_pad(n, target, align):
    """Tile (multiple of align, <= target) and padded extent (multiple of tile)."""
    tile = min(_round_up(n, align), max(align, (target // align) * align))
    return tile, _round_up(n, tile)


# ----------------------------------------------------------------------------
# Kernel 1: fused keypoint/center heatmap + conv_down, transposed outputs
# ----------------------------------------------------------------------------
def _head_kernel(x_ref, w_ref, b_ref, heat_ref, gf_ref, *, n_heat_pad, n_gf):
    # bf16 x bf16 matmul with f32 accumulation; bias add in f32.
    y = jnp.dot(x_ref[...], w_ref[...], preferred_element_type=jnp.float32)
    y = y + b_ref[...]                                  # (TM, 128)
    yT = y.T                                            # (128, TM) tile-aligned XLU transpose
    heat = jnp.clip(jax.nn.sigmoid(yT[:n_heat_pad]), 1e-4, 1.0 - 1e-4)
    heat_ref[...] = heat                                # lane-dense (n_heat_pad, TM) store
    gf_ref[...] = yT[n_heat_pad:n_heat_pad + n_gf].astype(jnp.bfloat16)


def fused_head(x2d, head_w, head_b, n_heat, n_gf, tm_target=1024):
    """x2d: (HW, C_in) bf16. head_w: (C_in, n_heat+n_gf) f32. Returns
    heat_T (n_heat, HW) f32 (clamped sigmoid) and gfT (n_gf, HW) bf16 (raw)."""
    M, K = x2d.shape
    n_heat_pad = _round_up(n_heat, 8)
    N = _round_up(n_heat_pad + n_gf, 128)               # lane-dense padded columns
    w = jnp.zeros((K, N), jnp.float32)
    w = w.at[:, :n_heat].set(head_w[:, :n_heat])
    w = w.at[:, n_heat_pad:n_heat_pad + n_gf].set(head_w[:, n_heat:])
    b = jnp.zeros((N,), jnp.float32)
    b = b.at[:n_heat].set(head_b[:n_heat])
    b = b.at[n_heat_pad:n_heat_pad + n_gf].set(head_b[n_heat:])
    w = w.astype(jnp.bfloat16)

    TM, Mp = _tile_and_pad(M, tm_target, 128)
    x = x2d if Mp == M else jnp.pad(x2d, ((0, Mp - M), (0, 0)))

    heat_T, gfT = pl.pallas_call(
        functools.partial(_head_kernel, n_heat_pad=n_heat_pad, n_gf=n_gf),
        out_shape=(jax.ShapeDtypeStruct((n_heat_pad, Mp), jnp.float32),
                   jax.ShapeDtypeStruct((n_gf, Mp), jnp.bfloat16)),
        grid=(Mp // TM,),
        in_specs=[
            pl.BlockSpec((TM, K), lambda i: (i, 0)),
            pl.BlockSpec((K, N), lambda i: (0, 0)),
            pl.BlockSpec((1, N), lambda i: (0, 0)),
        ],
        out_specs=(pl.BlockSpec((n_heat_pad, TM), lambda i: (0, i)),
                   pl.BlockSpec((n_gf, TM), lambda i: (0, i))),
        compiler_params=_cparams(("parallel",)),
    )(x, w, b.reshape(1, N))

    heat_T = heat_T[:n_heat]
    if Mp != M:
        heat_T = heat_T[:, :M]
        gfT = gfT[:, :M]
    return heat_T, gfT


# ----------------------------------------------------------------------------
# Kernel 2: center heatmap smoothing (avg pool via MXU) + separable max-pool NMS
# ----------------------------------------------------------------------------
def _shift_max(cur, a, d, axis):
    """max(cur, a shifted so position p holds a[p + d] along axis; OOB = -inf)."""
    H, W = a.shape
    if axis == 1:
        pad = jnp.full((H, abs(d)), -jnp.inf, a.dtype)
        s = (jnp.concatenate([a[:, d:], pad], axis=1) if d > 0
             else jnp.concatenate([pad, a[:, :W + d]], axis=1))
    else:
        pad = jnp.full((abs(d), W), -jnp.inf, a.dtype)
        s = (jnp.concatenate([a[d:, :], pad], axis=0) if d > 0
             else jnp.concatenate([pad, a[:H + d, :]], axis=0))
    return jnp.maximum(cur, s)


def _center_nms_kernel(hm_ref, ah_ref, aw_ref, o_ref, *, H, W, k):
    c = hm_ref[0]                                             # (H, W)
    # 3x3 avg pool (count_include_pad) as banded matmuls: (A_H @ c @ A_W) / 9
    box = jnp.dot(jnp.dot(ah_ref[...], c, preferred_element_type=jnp.float32),
                  aw_ref[...], preferred_element_type=jnp.float32)
    c2 = (c + box * (1.0 / 9.0)) * 0.5
    # kxk max pool (pad -inf) as a separable pass: 2k shifts+maxes instead of k^2.
    r = k // 2
    m = c2
    for d in range(1, r + 1):
        m = _shift_max(m, c2, d, axis=1)
        m = _shift_max(m, c2, -d, axis=1)
    m2 = m
    for d in range(1, r + 1):
        m2 = _shift_max(m2, m, d, axis=0)
        m2 = _shift_max(m2, m, -d, axis=0)
    keep = (m2 == c2).astype(jnp.float32)                     # keep comparison in f32
    o_ref[0] = c2 * keep


def center_nms(center):
    B, H, W = center.shape
    map_size = (H + W) / 2.0                                  # hierarchical_pool
    k = 7 if map_size > 300 else (5 if map_size > 200 else 3)
    ih = jnp.arange(H)
    ah = (jnp.abs(ih[:, None] - ih[None, :]) <= 1).astype(jnp.float32)
    iw = jnp.arange(W)
    aw = (jnp.abs(iw[:, None] - iw[None, :]) <= 1).astype(jnp.float32)
    return pl.pallas_call(
        functools.partial(_center_nms_kernel, H=H, W=W, k=k),
        out_shape=jax.ShapeDtypeStruct((B, H, W), jnp.float32),
        grid=(B,),
        in_specs=[
            pl.BlockSpec((1, H, W), lambda b: (b, 0, 0)),
            pl.BlockSpec((H, H), lambda b: (0, 0)),
            pl.BlockSpec((W, W), lambda b: (0, 0)),
        ],
        out_specs=pl.BlockSpec((1, H, W), lambda b: (b, 0, 0)),
        compiler_params=_cparams(("parallel",)),
    )(center, ah, aw)


# ----------------------------------------------------------------------------
# Kernel 3: channel+spatial attention params (one matmul) + per-instance fsum
# ----------------------------------------------------------------------------
def _attn_fsum_kernel(ip_ref, w_ref, b_ref, gfT_ref, cpar_ref, fsum_ref, *, n_gf):
    both = jnp.dot(ip_ref[...], w_ref[...], preferred_element_type=jnp.float32)
    both = both + b_ref[...]                                  # (N, 2*Cg) f32
    cpar_ref[...] = both[:, :n_gf]
    s_par = both[:, n_gf:]
    # fsum[n, p] = sum_c s_par[n, c] * gfT[c, p]
    fsum_ref[...] = jnp.dot(s_par.astype(jnp.bfloat16), gfT_ref[...],
                            preferred_element_type=jnp.float32)


def attn_params_and_fsum(instance_param, attn_w, attn_b, gfT):
    N, C_in = instance_param.shape
    Cg = attn_w.shape[1] // 2
    HW = gfT.shape[1]
    return pl.pallas_call(
        functools.partial(_attn_fsum_kernel, n_gf=Cg),
        out_shape=(jax.ShapeDtypeStruct((N, Cg), jnp.float32),
                   jax.ShapeDtypeStruct((N, HW), jnp.float32)),
        grid=(1,),
        in_specs=[
            pl.BlockSpec((N, C_in), lambda i: (0, 0)),
            pl.BlockSpec((C_in, 2 * Cg), lambda i: (0, 0)),
            pl.BlockSpec((1, 2 * Cg), lambda i: (0, 0)),
            pl.BlockSpec((Cg, HW), lambda i: (0, 0)),
        ],
        out_specs=(pl.BlockSpec((N, Cg), lambda i: (0, 0)),
                   pl.BlockSpec((N, HW), lambda i: (0, 0))),
        compiler_params=_cparams(("arbitrary",)),
    )(instance_param, attn_w, attn_b.reshape(1, 2 * Cg), gfT)


# ----------------------------------------------------------------------------
# Kernel 4: SpatialAtten 5x5 conv -> sigmoid mask.
#   The relative-coordinate channels are linear in (x_f, y_f), so their conv is
#   precomputed once (P1/P3/Q planes); only the fsum channel needs per-instance
#   banded MXU matmuls (5 horizontal + 5 vertical).
# ----------------------------------------------------------------------------
def _coord_conv_planes(sconv_w, sconv_b, H, W):
    """sconv_w: (3,5,5) channels (fsum, rel_x, rel_y); sconv_b: (1,)."""
    def conv5(plane, k5):
        return jax.lax.conv_general_dilated(
            plane[None, None], k5[None, None], window_strides=(1, 1),
            padding=((2, 2), (2, 2)),
            dimension_numbers=("NCHW", "OIHW", "NCHW"))[0, 0]
    ones = jnp.ones((H, W), jnp.float32)
    col = jnp.broadcast_to(jnp.arange(W, dtype=jnp.float32)[None, :], (H, W)) * (1.0 / 32.0)
    row = jnp.broadcast_to(jnp.arange(H, dtype=jnp.float32)[:, None], (H, W)) * (1.0 / 32.0)
    p1 = conv5(ones, sconv_w[1])     # coefficient of x_f/32
    p2 = conv5(col, sconv_w[1])
    p3 = conv5(ones, sconv_w[2])     # coefficient of y_f/32
    p4 = conv5(row, sconv_w[2])
    q = sconv_b[0] - p2 - p4         # constant plane (includes conv bias)
    return p1, p3, q


def _spatial_mask_kernel(coords_ref, fsum_ref, smat_ref, bmat_ref,
                         p1_ref, p3_ref, q_ref, o_ref, *, H, W):
    i = pl.program_id(0)
    y_f = coords_ref[i, 0].astype(jnp.float32)
    x_f = coords_ref[i, 1].astype(jnp.float32)
    acc = (q_ref[...]
           + (x_f * (1.0 / 32.0)) * p1_ref[...]
           + (y_f * (1.0 / 32.0)) * p3_ref[...])
    f = fsum_ref[0]                                            # (H, W)
    for ky in range(5):
        t = jnp.dot(f, bmat_ref[ky], preferred_element_type=jnp.float32)
        acc = acc + jnp.dot(smat_ref[ky], t, preferred_element_type=jnp.float32)
    o_ref[0] = jax.nn.sigmoid(acc)


def spatial_mask(fsum, coords, w_fsum, p1, p3, q):
    # fsum: (N, H, W) f32; coords: (N, 2) int32 (y, x); w_fsum: (5, 5) f32.
    N, H, W = fsum.shape
    hh = jnp.arange(H)
    kk = jnp.arange(5)
    # smat[ky, h', h] = 1 iff h == h' + (ky - 2)  (vertical shift with zero pad)
    smat = (hh[None, None, :] == (hh[None, :, None] + (kk[:, None, None] - 2))
            ).astype(jnp.float32)                              # (5, H, H)
    ww = jnp.arange(W)
    diff = ww[:, None] - ww[None, :] + 2                       # (w - w') + 2
    valid = (diff >= 0) & (diff < 5)
    bmat = jnp.where(valid[None], w_fsum[:, jnp.clip(diff, 0, 4)], 0.0)  # (5, W, W)
    # TODO(synk): on v6e/v7x, batching 2 instances per grid step would fill the
    # 256-row MXU; kept 1/step for simplicity.
    return pl.pallas_call(
        functools.partial(_spatial_mask_kernel, H=H, W=W),
        out_shape=jax.ShapeDtypeStruct((N, H, W), jnp.float32),
        grid=(N,),
        in_specs=[
            pl.BlockSpec(memory_space=pltpu.MemorySpace.SMEM),  # coords (N, 2)
            pl.BlockSpec((1, H, W), lambda i: (i, 0, 0)),
            pl.BlockSpec((5, H, H), lambda i: (0, 0, 0)),
            pl.BlockSpec((5, W, W), lambda i: (0, 0, 0)),
            pl.BlockSpec((H, W), lambda i: (0, 0)),
            pl.BlockSpec((H, W), lambda i: (0, 0)),
            pl.BlockSpec((H, W), lambda i: (0, 0)),
        ],
        out_specs=pl.BlockSpec((1, H, W), lambda i: (i, 0, 0)),
        compiler_params=_cparams(("parallel",)),
    )(coords, fsum, smat, bmat, p1, p3, q)


# ----------------------------------------------------------------------------
# Kernel 5: fused ChannelAtten / SpatialAtten / fuse_attn(+relu) / heatmap_conv
#   c-branch folded into fuse weights:   (fwc * cpar) @ gfT
#   s-branch applied post-matmul:        (fws @ gfT) * mask
#   so both big MXU matmuls consume bf16 gfT directly; VPU math stays f32.
# ----------------------------------------------------------------------------
def _instance_fuse_kernel(gfT_ref, cpar_ref, mask_ref, fwc_ref, fws_ref,
                          fb_ref, hw_ref, hb_ref, o_ref):
    g = gfT_ref[...]                                           # (Cg, THW) bf16
    wc = (fwc_ref[...] * cpar_ref[0]).astype(jnp.bfloat16)     # (Cg, Cg)
    c_part = jnp.dot(wc, g, preferred_element_type=jnp.float32)
    s_part = jnp.dot(fws_ref[...], g, preferred_element_type=jnp.float32) * mask_ref[0]
    fused = jnp.maximum(c_part + s_part + fb_ref[...], 0.0)
    heat = jnp.dot(hw_ref[...], fused, preferred_element_type=jnp.float32) + hb_ref[...]
    o_ref[0] = jnp.clip(jax.nn.sigmoid(heat), 1e-4, 1.0 - 1e-4)


def instance_fuse(gfT, c_params, mask_flat, fuse_wc, fuse_ws, fuse_b,
                  hm_w, hm_b, thw_target=8192):
    Cg, HW = gfT.shape
    N = c_params.shape[0]
    J = hm_w.shape[0]
    THW, HWp = _tile_and_pad(HW, thw_target, 128)
    if HWp != HW:
        gfT = jnp.pad(gfT, ((0, 0), (0, HWp - HW)))
        mask_flat = jnp.pad(mask_flat, ((0, 0), (0, HWp - HW)))
    nhw = HWp // THW
    cpar3 = c_params.reshape(N, 1, Cg)
    mask3 = mask_flat.reshape(N, 1, HWp)

    out = pl.pallas_call(
        _instance_fuse_kernel,
        out_shape=jax.ShapeDtypeStruct((N, J, HWp), jnp.float32),
        grid=(nhw, N),
        in_specs=[
            pl.BlockSpec((Cg, THW), lambda j, i: (0, j)),       # gfT (resident over i)
            pl.BlockSpec((1, 1, Cg), lambda j, i: (i, 0, 0)),   # channel-atten params
            pl.BlockSpec((1, 1, THW), lambda j, i: (i, 0, j)),  # spatial mask
            pl.BlockSpec((Cg, Cg), lambda j, i: (0, 0)),
            pl.BlockSpec((Cg, Cg), lambda j, i: (0, 0)),
            pl.BlockSpec((Cg, 1), lambda j, i: (0, 0)),
            pl.BlockSpec((J, Cg), lambda j, i: (0, 0)),
            pl.BlockSpec((J, 1), lambda j, i: (0, 0)),
        ],
        out_specs=pl.BlockSpec((1, J, THW), lambda j, i: (i, 0, j)),
        compiler_params=_cparams(("parallel", "parallel")),
    )(gfT, cpar3, mask3, fuse_wc, fuse_ws.astype(jnp.bfloat16), fuse_b, hm_w, hm_b)

    if HWp != HW:
        out = out[:, :, :HW]
    return out


# ----------------------------------------------------------------------------
# Parameter init (mirrors CIDHead.init_weights)
# ----------------------------------------------------------------------------
def init_params(key, in_channels, gfd_channels, num_joints, prior_prob=0.01):
    bias_value = -math.log((1 - prior_prob) / prior_prob)
    std = 0.001
    ks = jax.random.split(key, 7)

    def n(k, shape):
        return jax.random.normal(k, shape, jnp.float32) * std

    J, Cg, C_in = num_joints, gfd_channels, in_channels
    kc_w = n(ks[0], (J + 1, C_in))            # torch conv (out, in, 1, 1)
    down_w = n(ks[1], (Cg, C_in))
    catn_w = n(ks[2], (Cg, C_in))             # torch Linear (out, in)
    satn_w = n(ks[3], (Cg, C_in))
    sconv_w = n(ks[4], (1, 3, 5, 5))
    fuse_w = n(ks[5], (Cg, 2 * Cg))
    hm_w = n(ks[6], (J, Cg))
    return dict(
        head_w=jnp.concatenate([kc_w.T, down_w.T], axis=1),    # (C_in, J+1+Cg)
        head_b=jnp.concatenate([jnp.full((J + 1,), bias_value, jnp.float32),
                                jnp.zeros((Cg,), jnp.float32)]),
        catn_w=catn_w.T, catn_b=jnp.zeros((Cg,), jnp.float32),
        satn_w=satn_w.T, satn_b=jnp.zeros((Cg,), jnp.float32),
        sconv_w=sconv_w[0], sconv_b=jnp.zeros((1,), jnp.float32),
        fuse_wc=fuse_w[:, :Cg], fuse_ws=fuse_w[:, Cg:],
        fuse_b=jnp.zeros((Cg, 1), jnp.float32),
        hm_w=hm_w, hm_b=jnp.full((J, 1), bias_value, jnp.float32),
    )


# ----------------------------------------------------------------------------
# CIDHead forward_test (flip_test=False)
# ----------------------------------------------------------------------------
def cid_head_forward(features_list, params, max_proposals=8):
    f0 = features_list[0]
    B, _, H, W = f0.shape
    assert B == 1, "CIDHead forward_test supports a single image"
    HW = H * W

    # multi-scale fusion: bilinear upsample (align_corners=False) + concat (XLA glue),
    # cast to bf16 once (halves HBM traffic of the dominant streams).
    nhwc = []
    for i, f in enumerate(features_list):
        f = jnp.transpose(f, (0, 2, 3, 1))                    # NCHW -> NHWC
        if i > 0:
            f = jax.image.resize(f, (f.shape[0], H, W, f.shape[3]), method="bilinear")
        nhwc.append(f)
    features = jnp.concatenate(nhwc, axis=-1).astype(jnp.bfloat16)  # (1, H, W, C_in)
    C_in = features.shape[-1]
    x2d = features.reshape(HW, C_in)

    Cg = params["fuse_wc"].shape[0]
    J = params["hm_w"].shape[0]
    n_heat = J + 1

    # fused keypoint/center heatmap (clamped sigmoid) + conv_down, both transposed
    heat_T, gfT = fused_head(x2d, params["head_w"], params["head_b"],
                             n_heat=n_heat, n_gf=Cg)
    center_hm = heat_T[n_heat - 1].reshape(1, H, W)           # center channel

    # center smoothing + NMS
    center = center_nms(center_hm)

    # proposal selection (global top-k; XLA)
    scores, pos_ind = jax.lax.top_k(center.reshape(-1), max_proposals)
    # TODO(synk): PyTorch also drops proposals with score <= detection_threshold
    # (data-dependent output count); all top-k proposals are kept here.
    x_coord = (pos_ind % W).astype(jnp.int32)
    y_coord = (pos_ind // W).astype(jnp.int32)
    instance_coord = jnp.stack([y_coord, x_coord], axis=1)     # (N, 2) = (y, x)
    instance_param = features[0][y_coord, x_coord, :]          # (N, C_in) bf16 gather

    # attention params (single concatenated Linear) + per-instance fsum
    attn_w = jnp.concatenate([params["catn_w"], params["satn_w"]],
                             axis=1).astype(jnp.bfloat16)      # (C_in, 2Cg)
    attn_b = jnp.concatenate([params["catn_b"], params["satn_b"]])
    c_params, fsum = attn_params_and_fsum(instance_param, attn_w, attn_b, gfT)

    # SpatialAtten 5x5 conv mask (coordinate channels hoisted to constant planes)
    p1, p3, q = _coord_conv_planes(params["sconv_w"], params["sconv_b"], H, W)
    mask = spatial_mask(fsum.reshape(max_proposals, H, W), instance_coord,
                        params["sconv_w"][0], p1, p3, q)       # (N, H, W)

    # fused ChannelAtten / SpatialAtten / fuse_attn / heatmap_conv
    heatT = instance_fuse(gfT, c_params, mask.reshape(max_proposals, HW),
                          params["fuse_wc"], params["fuse_ws"], params["fuse_b"],
                          params["hm_w"], params["hm_b"])      # (N, J, HW)
    instance_heatmaps = heatT.reshape(max_proposals, J, H, W)
    return instance_heatmaps, scores


if __name__ == "__main__":
    key = jax.random.PRNGKey(0)
    kf = jax.random.split(key, 5)
    B = 1
    # small HRNet-style feature pyramid (NCHW), 8 channels per level
    feats = [
        jax.random.normal(kf[0], (B, 8, 16, 16), jnp.float32),
        jax.random.normal(kf[1], (B, 8, 8, 8), jnp.float32),
        jax.random.normal(kf[2], (B, 8, 4, 4), jnp.float32),
        jax.random.normal(kf[3], (B, 8, 2, 2), jnp.float32),
    ]
    in_channels, gfd_channels, num_joints = 32, 16, 8
    params = init_params(kf[4], in_channels, gfd_channels, num_joints)

    heatmaps, scores = cid_head_forward(feats, params, max_proposals=8)
    jax.block_until_ready((heatmaps, scores))
    assert heatmaps.shape == (8, num_joints, 16, 16)
    assert scores.shape == (8,)
    print("KERNEL_OK")
</pallas_src>

<mosaic_0001>
module attributes {stable_mosaic.version = 11 : i64} {
  func.func @_head_kernel(%arg0: i32, %arg1: memref<256x32xbf16, #tpu.memory_space<vmem>>, %arg2: memref<32x128xbf16, #tpu.memory_space<vmem>>, %arg3: memref<1x128xf32, #tpu.memory_space<vmem>>, %arg4: memref<16x256xf32, #tpu.memory_space<vmem>>, %arg5: memref<16x256xbf16, #tpu.memory_space<vmem>>) attributes {dimension_semantics = [#tpu.dimension_semantics<parallel>], iteration_bounds = array<i64: 1>, scalar_prefetch = 0 : i64, scratch_operands = 0 : i64, tpu.core_type = #tpu.core_type<tc>, window_params = [{transform_indices = @transform_0, window_bounds = array<i64: 256, 32>}, {pipeline_mode = #tpu.pipeline_mode<synchronous>, transform_indices = @transform_1, window_bounds = array<i64: 32, 128>}, {pipeline_mode = #tpu.pipeline_mode<synchronous>, transform_indices = @transform_2, window_bounds = array<i64: 1, 128>}, {transform_indices = @transform_3, window_bounds = array<i64: 16, 256>}, {transform_indices = @transform_4, window_bounds = array<i64: 16, 256>}]} {
    %c0 = arith.constant 0 : index
    %c0_0 = arith.constant 0 : index
    %0 = vector.load %arg1[%c0, %c0_0] : memref<256x32xbf16, #tpu.memory_space<vmem>>, vector<256x32xbf16>
    %c0_1 = arith.constant 0 : index
    %c0_2 = arith.constant 0 : index
    %1 = vector.load %arg2[%c0_1, %c0_2] : memref<32x128xbf16, #tpu.memory_space<vmem>>, vector<32x128xbf16>
    %cst = arith.constant dense<0.000000e+00> : vector<256x128xf32>
    %2 = tpu.matmul %0, %1, %cst {dimension_numbers = #tpu.dot_dimension_numbers<[1], [0], [0], [1], [0, 0, 1, 1], [], []>} : vector<256x32xbf16>, vector<32x128xbf16>, vector<256x128xf32> -> vector<256x128xf32>
    %c0_3 = arith.constant 0 : index
    %c0_4 = arith.constant 0 : index
    %3 = vector.load %arg3[%c0_3, %c0_4] : memref<1x128xf32, #tpu.memory_space<vmem>>, vector<1x128xf32>
    %4 = vector.broadcast %3 : vector<1x128xf32> to vector<256x128xf32>
    %5 = arith.addf %2, %4 : vector<256x128xf32>
    %6 = tpu.transpose %5, [1, 0] : vector<256x128xf32> -> vector<128x256xf32>
    %7 = vector.extract_strided_slice %6 {offsets = [0, 0], sizes = [16, 256], strides = [1, 1]} : vector<128x256xf32> to vector<16x256xf32>
    %8 = arith.negf %7 : vector<16x256xf32>
    %9 = math.exp %8 : vector<16x256xf32>
    %cst_5 = arith.constant 1.000000e+00 : f32
    %10 = vector.broadcast %cst_5 : f32 to vector<16x256xf32>
    %11 = arith.addf %10, %9 : vector<16x256xf32>
    %12 = arith.divf %10, %11 : vector<16x256xf32>
    %cst_6 = arith.constant 9.99999974E-5 : f32
    %cst_7 = arith.constant 0.999899983 : f32
    %13 = vector.broadcast %cst_6 : f32 to vector<16x256xf32>
    %14 = arith.maximumf %13, %12 : vector<16x256xf32>
    %15 = vector.broadcast %cst_7 : f32 to vector<16x256xf32>
    %16 = arith.minimumf %15, %14 : vector<16x256xf32>
    %c0_8 = arith.constant 0 : index
    %c0_9 = arith.constant 0 : index
    %17 = vector.load %arg4[%c0_8, %c0_9] : memref<16x256xf32, #tpu.memory_space<vmem>>, vector<16x256xf32>
    tpu.vector_store %arg4[%c0_8, %c0_9], %16 {strides = array<i32>} : memref<16x256xf32, #tpu.memory_space<vmem>>, vector<16x256xf32>,
    %18 = vector.extract_strided_slice %6 {offsets = [16, 0], sizes = [16, 256], strides = [1, 1]} : vector<128x256xf32> to vector<16x256xf32>
    %19 = arith.truncf %18 : vector<16x256xf32> to vector<16x256xbf16>
    %c0_10 = arith.constant 0 : index
    %c0_11 = arith.constant 0 : index
    %20 = vector.load %arg5[%c0_10, %c0_11] : memref<16x256xbf16, #tpu.memory_space<vmem>>, vector<16x256xbf16>
    tpu.vector_store %arg5[%c0_10, %c0_11], %19 {strides = array<i32>} : memref<16x256xbf16, #tpu.memory_space<vmem>>, vector<16x256xbf16>,
    return
  }
  func.func @transform_0(%arg0: i32) -> (i32, i32) {
    %c0_i32 = arith.constant 0 : i32
    %c0_i32_0 = arith.constant 0 : i32
    return %arg0, %c0_i32 : i32, i32
  }
  func.func @transform_1(%arg0: i32) -> (i32, i32) {
    %c0_i32 = arith.constant 0 : i32
    %c0_i32_0 = arith.constant 0 : i32
    %c0_i32_1 = arith.constant 0 : i32
    return %c0_i32, %c0_i32_0 : i32, i32
  }
  func.func @transform_2(%arg0: i32) -> (i32, i32) {
    %c0_i32 = arith.constant 0 : i32
    %c0_i32_0 = arith.constant 0 : i32
    %c0_i32_1 = arith.constant 0 : i32
    return %c0_i32, %c0_i32_0 : i32, i32
  }
  func.func @transform_3(%arg0: i32) -> (i32, i32) {
    %c0_i32 = arith.constant 0 : i32
    %c0_i32_0 = arith.constant 0 : i32
    return %c0_i32, %arg0 : i32, i32
  }
  func.func @transform_4(%arg0: i32) -> (i32, i32) {
    %c0_i32 = arith.constant 0 : i32
    %c0_i32_0 = arith.constant 0 : i32
    return %c0_i32, %arg0 : i32, i32
  }
}

</mosaic_0001>

<llo_original>
// kernel: tpu_custom_call.1
$region0: #{tpu_custom_call.1}
  #allocation0 [shape = 'u32[]', space=smem, size = 0x4, offset = 0x4, fixed_abs, tag = 'smem constant byte address 0x4 - core index']
  #allocation1 [shape = 'u32[144,128]{1,0:T(1,128)}', space=vmem, size = 0x12000, scoped, tag = 'internal scratch']
  %s0 = inlined_call_operand.vmem [shape: bf16[256,32], index: 0, kind: input, shape index: {}]
  %s1 = inlined_call_operand.vmem [shape: bf16[32,128], index: 1, kind: input, shape index: {}]
  %s2 = inlined_call_operand.vmem [shape: f32[1,128], index: 2, kind: input, shape index: {}]
  %s3 = inlined_call_operand.hbm [shape: f32[16,256], index: 3, kind: output, shape index: {0}]
  %s4 = inlined_call_operand.hbm [shape: bf16[16,256], index: 4, kind: output, shape index: {1}]
  %5 = xla_tuple %s3, %s4
  %s6 = sld [smem:[#allocation0]]
  $region30: #{tpu_custom_call.1} parent=0
    _
  %s8 = ssub.s32 1, %s6
  %s9 = scalar_select 0, %s8, %s6
  $region1: #{tpu_custom_call.1} parent=0
    #allocation2 [shape = 'u8[16384]{0}', space=vmem, size = 0x4000, scoped, tag = 'output window, operand 0, single buffered']
    #allocation3 [shape = 's32[1]{0}', space=sflag, size = 0x4, scoped, tag = 'scoped memory for tpu_custom_call.1']
    #allocation4 [shape = 'u8[8192]{0}', space=vmem, size = 0x2000, scoped, tag = 'output window, operand 1, single buffered']
    #allocation5 [shape = 's32[1]{0}', space=sflag, size = 0x4, scoped, tag = 'scoped memory for tpu_custom_call.1']
    %10 = vsyncpa [#allocation3], 0
    %11 = vsyncpa [#allocation5], 0
    // Predicated region
    $region2: #{tpu_custom_call.1} parent=1 // pred_check
      _
    $region3: #{tpu_custom_call.1} parent=1 // pred_check_branch
      %13 = sbr.rel (0) target = $region5
    $region4: #{tpu_custom_call.1} parent=1 // pred_region
      _
    $region5: #{tpu_custom_call.1} parent=1 // pred_fallthru
      _
    // Predicated region
    $region6: #{tpu_custom_call.1} parent=1 // pred_check
      _
    $region7: #{tpu_custom_call.1} parent=1 // pred_check_branch
      %15 = sbr.rel (0) target = $region9
    $region8: #{tpu_custom_call.1} parent=1 // pred_region
      _
    $region9: #{tpu_custom_call.1} parent=1 // pred_fallthru
      _
    // Predicated region
    $region10: #{tpu_custom_call.1} parent=1 // pred_check
      _
    $region11: #{tpu_custom_call.1} parent=1 // pred_check_branch
      %17 = sbr.rel (0) target = $region13
    $region12: #{tpu_custom_call.1} parent=1 // pred_region
      _
    $region13: #{tpu_custom_call.1} parent=1 // pred_fallthru
      _
    %v19 = vld [vmem:[%s0] sm:$0xf]
    %v20 = vld [vmem:[%s0 + $0x4] sm:$0xf]
    %v21 = vld [vmem:[%s0 + $0x8] sm:$0xf]
    %v22 = vld [vmem:[%s0 + $0xc] sm:$0xf]
    %v23 = vld [vmem:[%s0 + $0x10] sm:$0xf]
    %v24 = vld [vmem:[%s0 + $0x14] sm:$0xf]
    %v25 = vld [vmem:[%s0 + $0x18] sm:$0xf]
    %v26 = vld [vmem:[%s0 + $0x1c] sm:$0xf]
    %v27 = vld [vmem:[%s0 + $0x20] sm:$0xf]
    %v28 = vld [vmem:[%s0 + $0x24] sm:$0xf]
    %v29 = vld [vmem:[%s0 + $0x28] sm:$0xf]
    %v30 = vld [vmem:[%s0 + $0x2c] sm:$0xf]
    %v31 = vld [vmem:[%s0 + $0x30] sm:$0xf]
    %v32 = vld [vmem:[%s0 + $0x34] sm:$0xf]
    %v33 = vld [vmem:[%s0 + $0x38] sm:$0xf]
    %v34 = vld [vmem:[%s0 + $0x3c] sm:$0xf]
    %v35 = vld [vmem:[%s0 + $0x40] sm:$0xf]
    %v36 = vld [vmem:[%s0 + $0x44] sm:$0xf]
    %v37 = vld [vmem:[%s0 + $0x48] sm:$0xf]
    %v38 = vld [vmem:[%s0 + $0x4c] sm:$0xf]
    %v39 = vld [vmem:[%s0 + $0x50] sm:$0xf]
    %v40 = vld [vmem:[%s0 + $0x54] sm:$0xf]
    %v41 = vld [vmem:[%s0 + $0x58] sm:$0xf]
    %v42 = vld [vmem:[%s0 + $0x5c] sm:$0xf]
    %v43 = vld [vmem:[%s0 + $0x60] sm:$0xf]
    %v44 = vld [vmem:[%s0 + $0x64] sm:$0xf]
    %v45 = vld [vmem:[%s0 + $0x68] sm:$0xf]
    %v46 = vld [vmem:[%s0 + $0x6c] sm:$0xf]
    %v47 = vld [vmem:[%s0 + $0x70] sm:$0xf]
    %v48 = vld [vmem:[%s0 + $0x74] sm:$0xf]
    %v49 = vld [vmem:[%s0 + $0x78] sm:$0xf]
    %v50 = vld [vmem:[%s0 + $0x7c] sm:$0xf]
    %v51 = vld [vmem:[%s1] sm:$0xf]
    %v52 = vld [vmem:[%s1 + $0x4] sm:$0xf]
    %v53 = vld [vmem:[%s1 + $0x8] sm:$0xf]
    %v54 = vld [vmem:[%s1 + $0xc] sm:$0xf]
    %v55 = vld [vmem:[%s2] sm:$0x1]
    %v57 = vlaneseq
    %v58 = vshrl.u32 %v57, 7
    %v59 = vsub.s32 0, %v58
    %v60 = vrot.slane %v55, %v59
    %v94 = vunpack.c.l.b16 %v19
    %v95 = vunpack.c.l.b16 %v20
    %v96 = vunpack.c.l.b16 %v21
    %v97 = vunpack.c.l.b16 %v22
    %v98 = vunpack.c.l.b16 %v23
    %v99 = vunpack.c.l.b16 %v24
    %v100 = vunpack.c.l.b16 %v25
    %v101 = vunpack.c.l.b16 %v26
    %v102 = vunpack.c.l.b16 %v27
    %v103 = vunpack.c.l.b16 %v28
    %v104 = vunpack.c.l.b16 %v29
    %v105 = vunpack.c.l.b16 %v30
    %v106 = vunpack.c.l.b16 %v31
    %v107 = vunpack.c.l.b16 %v32
    %v108 = vunpack.c.l.b16 %v33
    %v109 = vunpack.c.l.b16 %v34
    %v110 = vunpack.c.l.b16 %v35
    %v111 = vunpack.c.l.b16 %v36
    %v112 = vunpack.c.l.b16 %v37
    %v113 = vunpack.c.l.b16 %v38
    %v114 = vunpack.c.l.b16 %v39
    %v115 = vunpack.c.l.b16 %v40
    %v116 = vunpack.c.l.b16 %v41
    %v117 = vunpack.c.l.b16 %v42
    %v118 = vunpack.c.l.b16 %v43
    %v119 = vunpack.c.l.b16 %v44
    %v120 = vunpack.c.l.b16 %v45
    %v121 = vunpack.c.l.b16 %v46
    %v122 = vunpack.c.l.b16 %v47
    %v123 = vunpack.c.l.b16 %v48
    %v124 = vunpack.c.l.b16 %v49
    %v125 = vunpack.c.l.b16 %v50
    %v126 = vpack.c.b16 %v95, %v94
    %v127 = vpack.c.b16 %v97, %v96
    %v128 = vpack.c.b16 %v99, %v98
    %v129 = vpack.c.b16 %v101, %v100
    %v130 = vpack.c.b16 %v103, %v102
    %v131 = vpack.c.b16 %v105, %v104
    %v132 = vpack.c.b16 %v107, %v106
    %v133 = vpack.c.b16 %v109, %v108
    %v134 = vpack.c.b16 %v111, %v110
    %v135 = vpack.c.b16 %v113, %v112
    %v136 = vpack.c.b16 %v115, %v114
    %v137 = vpack.c.b16 %v117, %v116
    %v138 = vpack.c.b16 %v119, %v118
    %v139 = vpack.c.b16 %v121, %v120
    %v140 = vpack.c.b16 %v123, %v122
    %v141 = vpack.c.b16 %v125, %v124
    %v146 = vunpack.c.l.b16 %v51
    %v147 = vunpack.c.l.b16 %v52
    %v148 = vunpack.c.l.b16 %v53
    %v149 = vunpack.c.l.b16 %v54
    %v150 = vpack.c.b16 %v147, %v146
    %v151 = vpack.c.b16 %v149, %v148
    %vm154 = vcmask 261120
    %v156 = vsel %vm154, %v126, 0
    %v159 = vsel %vm154, %v127, 0
    %v162 = vsel %vm154, %v128, 0
    %v165 = vsel %vm154, %v129, 0
    %v168 = vsel %vm154, %v130, 0
    %v171 = vsel %vm154, %v131, 0
    %v174 = vsel %vm154, %v132, 0
    %v177 = vsel %vm154, %v133, 0
    %v180 = vsel %vm154, %v134, 0
    %v183 = vsel %vm154, %v135, 0
    %v186 = vsel %vm154, %v136, 0
    %v189 = vsel %vm154, %v137, 0
    %v192 = vsel %vm154, %v138, 0
    %v195 = vsel %vm154, %v139, 0
    %v198 = vsel %vm154, %v140, 0
    %v201 = vsel %vm154, %v141, 0
    %203 = vmatprep.subr.bf16.mxu0 0
    %204 = vmatpush1.bf16.msra.mxu0 0
    %205 = vmatprep.subr.bf16.mxu0 0
    %206 = vmatpush1.bf16.msra.mxu0 0
    %207 = vmatprep.subr.bf16.mxu0 0
    %208 = vmatpush1.bf16.msra.mxu0 0
    %209 = vmatprep.subr.bf16.mxu0 0
    %210 = vmatpush1.bf16.msra.mxu0 0
    %211 = vmatprep.subr.bf16.mxu0 0
    %212 = vmatpush1.bf16.msra.mxu0 0
    %213 = vmatprep.subr.bf16.mxu0 0
    %214 = vmatpush1.bf16.msra.mxu0 0
    %215 = vmatprep.subr.bf16.mxu0 0
    %216 = vmatpush1.bf16.msra.mxu0 %v151
    %217 = vmatprep.subr.bf16.mxu0 0
    %218 = vmatpush1.bf16.msra.mxu0 %v150
    %219 = vmatprep.subr.bf16.mxu0 0
    %220 = vmatpush2.bf16.msra.mxu0 0
    %221 = vmatprep.subr.bf16.mxu0 0
    %222 = vmatpush2.bf16.msra.mxu0 0
    %223 = vmatprep.subr.bf16.mxu0 0
    %224 = vmatpush2.bf16.msra.mxu0 0
    %225 = vmatprep.subr.bf16.mxu0 0
    %226 = vmatpush2.bf16.msra.mxu0 0
    %227 = vmatprep.subr.bf16.mxu0 0
    %228 = vmatpush2.bf16.msra.mxu0 0
    %229 = vmatprep.subr.bf16.mxu0 0
    %230 = vmatpush2.bf16.msra.mxu0 0
    %231 = vmatprep.subr.bf16.mxu0 0
    %232 = vmatpush2.bf16.msra.mxu0 0
    %233 = vmatprep.subr.bf16.mxu0 0
    %234 = vmatpush2.bf16.msra.mxu0 0
    %235 = vmatprep.mubr.bf16.mxu0 0
    %236 = vmatmul.mubr.bf16.gmra.mxu0 %v156
    %v237 = vpop.f32.mrf.mxu0
    %v238 = vadd.f32 %v60, %v237
    %v239 = vpop.f32.mrf.mxu0
    %v240 = vpop.f32.mrf.mxu0
    %v241 = vadd.f32 %v60, %v240
    %v242 = vpop.f32.mrf.mxu0
    %243 = vmatprep.mubr.bf16.mxu0 0
    %244 = vmatmul.mubr.bf16.gmra.mxu0 %v159
    %v245 = vpop.f32.mrf.mxu0
    %v246 = vadd.f32 %v60, %v245
    %v247 = vpop.f32.mrf.mxu0
    %v248 = vpop.f32.mrf.mxu0
    %v249 = vadd.f32 %v60, %v248
    %v250 = vpop.f32.mrf.mxu0
    %251 = vmatprep.mubr.bf16.mxu0 0
    %252 = vmatmul.mubr.bf16.gmra.mxu0 %v162
    %v253 = vpop.f32.mrf.mxu0
    %v254 = vadd.f32 %v60, %v253
    %v255 = vpop.f32.mrf.mxu0
    %v256 = vpop.f32.mrf.mxu0
    %v257 = vadd.f32 %v60, %v256
    %v258 = vpop.f32.mrf.mxu0
    %259 = vmatprep.mubr.bf16.mxu0 0
    %260 = vmatmul.mubr.bf16.gmra.mxu0 %v165
    %v261 = vpop.f32.mrf.mxu0
    %v262 = vadd.f32 %v60, %v261
    %v263 = vpop.f32.mrf.mxu0
    %v264 = vpop.f32.mrf.mxu0
    %v265 = vadd.f32 %v60, %v264
    %v266 = vpop.f32.mrf.mxu0
    %267 = vmatprep.mubr.bf16.mxu0 0
    %268 = vmatmul.mubr.bf16.gmra.mxu0 %v168
    %v269 = vpop.f32.mrf.mxu0
    %v270 = vadd.f32 %v60, %v269
    %v271 = vpop.f32.mrf.mxu0
    %v272 = vpop.f32.mrf.mxu0
    %v273 = vadd.f32 %v60, %v272
    %v274 = vpop.f32.mrf.mxu0
    %275 = vmatprep.mubr.bf16.mxu0 0
    %276 = vmatmul.mubr.bf16.gmra.mxu0 %v171
    %v277 = vpop.f32.mrf.mxu0
    %v278 = vadd.f32 %v60, %v277
    %v279 = vpop.f32.mrf.mxu0
    %v280 = vpop.f32.mrf.mxu0
    %v281 = vadd.f32 %v60, %v280
    %v282 = vpop.f32.mrf.mxu0
    %283 = vmatprep.mubr.bf16.mxu0 0
    %284 = vmatmul.mubr.bf16.gmra.mxu0 %v174
    %v285 = vpop.f32.mrf.mxu0
    %v286 = vadd.f32 %v60, %v285
    %v287 = vpop.f32.mrf.mxu0
    %v288 = vpop.f32.mrf.mxu0
    %v289 = vadd.f32 %v60, %v288
    %v290 = vpop.f32.mrf.mxu0
    %291 = vmatprep.mubr.bf16.mxu0 0
    %292 = vmatmul.mubr.bf16.gmra.mxu0 %v177
    %v293 = vpop.f32.mrf.mxu0
    %v294 = vadd.f32 %v60, %v293
    %v295 = vpop.f32.mrf.mxu0
    %v296 = vpop.f32.mrf.mxu0
    %v297 = vadd.f32 %v60, %v296
    %v298 = vpop.f32.mrf.mxu0
    %299 = vmatprep.mubr.bf16.mxu0 0
    %300 = vmatmul.mubr.bf16.gmra.mxu0 %v180
    %v301 = vpop.f32.mrf.mxu0
    %v302 = vadd.f32 %v60, %v301
    %v303 = vpop.f32.mrf.mxu0
    %v304 = vpop.f32.mrf.mxu0
    %v305 = vadd.f32 %v60, %v304
    %v306 = vpop.f32.mrf.mxu0
    %307 = vmatprep.mubr.bf16.mxu0 0
    %308 = vmatmul.mubr.bf16.gmra.mxu0 %v183
    %v309 = vpop.f32.mrf.mxu0
    %v310 = vadd.f32 %v60, %v309
    %v311 = vpop.f32.mrf.mxu0
    %v312 = vpop.f32.mrf.mxu0
    %v313 = vadd.f32 %v60, %v312
    %v314 = vpop.f32.mrf.mxu0
    %315 = vmatprep.mubr.bf16.mxu0 0
    %316 = vmatmul.mubr.bf16.gmra.mxu0 %v186
    %v317 = vpop.f32.mrf.mxu0
    %v318 = vadd.f32 %v60, %v317
    %v319 = vpop.f32.mrf.mxu0
    %v320 = vpop.f32.mrf.mxu0
    %v321 = vadd.f32 %v60, %v320
    %v322 = vpop.f32.mrf.mxu0
    %323 = vmatprep.mubr.bf16.mxu0 0
    %324 = vmatmul.mubr.bf16.gmra.mxu0 %v189
    %v325 = vpop.f32.mrf.mxu0
    %v326 = vadd.f32 %v60, %v325
    %v327 = vpop.f32.mrf.mxu0
    %v328 = vpop.f32.mrf.mxu0
    %v329 = vadd.f32 %v60, %v328
    %v330 = vpop.f32.mrf.mxu0
    %331 = vmatprep.mubr.bf16.mxu0 0
    %332 = vmatmul.mubr.bf16.gmra.mxu0 %v192
    %v333 = vpop.f32.mrf.mxu0
    %v334 = vadd.f32 %v60, %v333
    %v335 = vpop.f32.mrf.mxu0
    %v336 = vpop.f32.mrf.mxu0
    %v337 = vadd.f32 %v60, %v336
    %v338 = vpop.f32.mrf.mxu0
    %339 = vmatprep.mubr.bf16.mxu0 0
    %340 = vmatmul.mubr.bf16.gmra.mxu0 %v195
    %v341 = vpop.f32.mrf.mxu0
    %v342 = vadd.f32 %v60, %v341
    %v343 = vpop.f32.mrf.mxu0
    %v344 = vpop.f32.mrf.mxu0
    %v345 = vadd.f32 %v60, %v344
    %v346 = vpop.f32.mrf.mxu0
    %347 = vmatprep.mubr.bf16.mxu0 0
    %348 = vmatmul.mubr.bf16.gmra.mxu0 %v198
    %v349 = vpop.f32.mrf.mxu0
    %v350 = vadd.f32 %v60, %v349
    %v351 = vpop.f32.mrf.mxu0
    %v352 = vpop.f32.mrf.mxu0
    %v353 = vadd.f32 %v60, %v352
    %v354 = vpop.f32.mrf.mxu0
    %355 = vmatprep.mubr.bf16.mxu0 0
    %356 = vmatmul.mubr.bf16.gmra.mxu0 %v201
    %v357 = vpop.f32.mrf.mxu0
    %v358 = vadd.f32 %v60, %v357
    %v359 = vpop.f32.mrf.mxu0
    %v360 = vpop.f32.mrf.mxu0
    %v361 = vadd.f32 %v60, %v360
    %v362 = vpop.f32.mrf.mxu0
    %363 = vdwg.mxu0
    %364 = vxpose.xlu0.b32.start [1/16] %v238, 128
    %365 = vxpose.xlu0.b32.cont [2/16] %v241, 128
    %366 = vxpose.xlu0.b32.cont [3/16] %v246, 128
    %367 = vxpose.xlu0.b32.cont [4/16] %v249, 128
    %368 = vxpose.xlu0.b32.cont [5/16] %v254, 128
    %369 = vxpose.xlu0.b32.cont [6/16] %v257, 128
    %370 = vxpose.xlu0.b32.cont [7/16] %v262, 128
    %371 = vxpose.xlu0.b32.cont [8/16] %v265, 128
    %372 = vxpose.xlu0.b32.cont [9/16] %v270, 128
    %373 = vxpose.xlu0.b32.cont [10/16] %v273, 128
    %374 = vxpose.xlu0.b32.cont [11/16] %v278, 128
    %375 = vxpose.xlu0.b32.cont [12/16] %v281, 128
    %376 = vxpose.xlu0.b32.cont [13/16] %v286, 128
    %377 = vxpose.xlu0.b32.cont [14/16] %v289, 128
    %378 = vxpose.xlu0.b32.cont [15/16] %v294, 128
    %379 = vxpose.xlu0.b32.end [16/16] %v297, 128
    %v380 = vpop.trf.xlu0
    %v381 = vpop.trf.xlu0
    %v382 = vpop.trf.xlu0
    %v383 = vpop.trf.xlu0
    %v384 = vpop.trf.xlu0
    %v385 = vpop.trf.xlu0
    %v386 = vpop.trf.xlu0
    %v387 = vpop.trf.xlu0
    %v388 = vpop.trf.xlu0
    %v389 = vpop.trf.xlu0
    %v390 = vpop.trf.xlu0
    %v391 = vpop.trf.xlu0
    %v392 = vpop.trf.xlu0
    %v393 = vpop.trf.xlu0
    %v394 = vpop.trf.xlu0
    %v395 = vpop.trf.xlu0
    %396 = vxpose.xlu0.b32.start [1/16] %v302, 128
    %397 = vxpose.xlu0.b32.cont [2/16] %v305, 128
    %398 = vxpose.xlu0.b32.cont [3/16] %v310, 128
    %399 = vxpose.xlu0.b32.cont [4/16] %v313, 128
    %400 = vxpose.xlu0.b32.cont [5/16] %v318, 128
    %401 = vxpose.xlu0.b32.cont [6/16] %v321, 128
    %402 = vxpose.xlu0.b32.cont [7/16] %v326, 128
    %403 = vxpose.xlu0.b32.cont [8/16] %v329, 128
    %404 = vxpose.xlu0.b32.cont [9/16] %v334, 128
    %405 = vxpose.xlu0.b32.cont [10/16] %v337, 128
    %406 = vxpose.xlu0.b32.cont [11/16] %v342, 128
    %407 = vxpose.xlu0.b32.cont [12/16] %v345, 128
    %408 = vxpose.xlu0.b32.cont [13/16] %v350, 128
    %409 = vxpose.xlu0.b32.cont [14/16] %v353, 128
    %410 = vxpose.xlu0.b32.cont [15/16] %v358, 128
    %411 = vxpose.xlu0.b32.end [16/16] %v361, 128
    %v412 = vpop.trf.xlu0
    %v413 = vpop.trf.xlu0
    %v414 = vpop.trf.xlu0
    %v415 = vpop.trf.xlu0
    %v416 = vpop.trf.xlu0
    %v417 = vpop.trf.xlu0
    %v418 = vpop.trf.xlu0
    %v419 = vpop.trf.xlu0
    %v420 = vpop.trf.xlu0
    %v421 = vpop.trf.xlu0
    %v422 = vpop.trf.xlu0
    %v423 = vpop.trf.xlu0
    %v424 = vpop.trf.xlu0
    %v425 = vpop.trf.xlu0
    %v426 = vpop.trf.xlu0
    %v427 = vpop.trf.xlu0
    %v428 = vxor.u32 %v380, 2147483648
    %v429 = vxor.u32 %v412, 2147483648
    %v430 = vxor.u32 %v381, 2147483648
    %v431 = vxor.u32 %v413, 2147483648
    %v432 = vmul.f32 %v428, 1.442695
    %v433 = vpow.pop %v432
    %v434 = vmul.f32 %v429, 1.442695
    %v435 = vpow.pop %v434
    %v436 = vmul.f32 %v430, 1.442695
    %v437 = vpow.pop %v436
    %v438 = vmul.f32 %v431, 1.442695
    %v439 = vpow.pop %v438
    %v440 = vadd.f32 %v433, 1.0
    %v441 = vadd.f32 %v435, 1.0
    %v442 = vadd.f32 %v437, 1.0
    %v443 = vadd.f32 %v439, 1.0
    %v444 = vrcp.pop %v440
    %v445 = vmul.f32 1.0, %v444
    %v446 = vrcp.pop %v441
    %v447 = vmul.f32 1.0, %v446
    %v448 = vrcp.pop %v442
    %v449 = vmul.f32 1.0, %v448
    %v450 = vrcp.pop %v443
    %v451 = vmul.f32 1.0, %v450
    %v452 = vmax.f32 %v445, 0.0001
    %v453 = vmax.f32 %v447, 0.0001
    %v454 = vmax.f32 %v449, 0.0001
    %v455 = vmax.f32 %v451, 0.0001
    %v456 = vmin.f32 %v452, 0.9999
    %v457 = vmin.f32 %v453, 0.9999
    %v458 = vmin.f32 %v454, 0.9999
    %v459 = vmin.f32 %v455, 0.9999
    %460 = vst [vmem:[#allocation2] sm:$0xff] %v456
    %461 = vst [vmem:[#allocation2 + $0x8] sm:$0xff] %v457
    %462 = vst [vmem:[#allocation2 + $0x10] sm:$0xff] %v458
    %463 = vst [vmem:[#allocation2 + $0x18] sm:$0xff] %v459
    %v464 = vpack.c.bf16 %v383, %v382
    %v465 = vpack.c.bf16 %v415, %v414
    %v468 = vunpack.c.l.b16 %v464
    %v469 = vunpack.c.l.b16 %v465
    %v470 = vunpack.c.h.b16 %v464
    %v471 = vunpack.c.h.b16 %v465
    %v472 = vpack.c.b16 %v469, %v468
    %v473 = vpack.c.b16 %v471, %v470
    %476 = vst [vmem:[#allocation4] sm:$0xff] %v472
    %477 = vst [vmem:[#allocation4 + $0x8] sm:$0xff] %v473
    // Predicated region
    $region14: #{tpu_custom_call.1} parent=1 // pred_check
      _
    $region15: #{tpu_custom_call.1} parent=1 // pred_check_branch
      %479 = sbr.rel (0) target = $region17
    $region16: #{tpu_custom_call.1} parent=1 // pred_region
      %s481 = ssub.s32 512, 512
      %482 = vsyncadd [#allocation3], %s481
      %s483 = sshll.u32 [#allocation2], 4
      %s484 = int_to_ptr.vmem [resolvable:$true] %s483
      %489 = dma.vmem_to_hbm [thread:$0]  %s484, 512, %s3, [#allocation3], 256, 256, 16
    $region17: #{tpu_custom_call.1} parent=1 // pred_fallthru
      _
    // Predicated region
    $region18: #{tpu_custom_call.1} parent=1 // pred_check
      _
    $region19: #{tpu_custom_call.1} parent=1 // pred_check_branch
      %491 = sbr.rel (0) target = $region21
    $region20: #{tpu_custom_call.1} parent=1 // pred_region
      %s493 = ssub.s32 256, 256
      %494 = vsyncadd [#allocation5], %s493
      %s495 = sshll.u32 [#allocation4], 4
      %s496 = int_to_ptr.vmem [resolvable:$true] %s495
      %501 = dma.vmem_to_hbm [thread:$0]  %s496, 256, %s4, [#allocation5], 128, 128, 8
    $region21: #{tpu_custom_call.1} parent=1 // pred_fallthru
      _
    // Predicated region
    $region22: #{tpu_custom_call.1} parent=1 // pred_check
      _
    $region23: #{tpu_custom_call.1} parent=1 // pred_check_branch
      %503 = sbr.rel (0) target = $region25
    $region24: #{tpu_custom_call.1} parent=1 // pred_region
      %504 = dma.done [#allocation3], 512
    $region25: #{tpu_custom_call.1} parent=1 // pred_fallthru
      _
    // Predicated region
    $region26: #{tpu_custom_call.1} parent=1 // pred_check
      _
    $region27: #{tpu_custom_call.1} parent=1 // pred_check_branch
      %506 = sbr.rel (0) target = $region29
    $region28: #{tpu_custom_call.1} parent=1 // pred_region
      %507 = dma.done [#allocation5], 256
    $region29: #{tpu_custom_call.1} parent=1 // pred_fallthru
      _
    %508 = vsyncpa [#allocation3], 1
    %509 = vsyncpa [#allocation5], 1

</llo_original>
